<compile_context>
chip_gen: v5e
topology: v5e:2x2
jax: 0.10.0
libtpu: 0.0.40
codegen_flags: <defaults>
</compile_context>

<pallas_src>
import jax
import jax.numpy as jnp
from jax import lax
from jax.experimental import pallas as pl
from jax.experimental.pallas import tpu as pltpu

_MAX_BLOCK_ONEHOT = 256              # rows gathered per grid step (MXU path)
_MAX_BLOCK_DMA = 128                 # rows gathered per grid step (row-DMA path)
_ONEHOT_MAX_VOCAB = 2048             # one-hot matmul only pays off for small vocabs
_VMEM_TABLE_BUDGET = 4 * 1024 * 1024 # keep a resident table well under scoped VMEM


def _round_up(x, m):
    return (x + m - 1) // m * m


# ---------------------------------------------------------------------------
# Path A: small vocab, table resident in VMEM, one-hot gather on the MXU.
# ---------------------------------------------------------------------------
def _onehot_gather_kernel(ids_ref, table_ref, out_ref):
    """Gather `block` rows per grid step via a one-hot matmul on the MXU.

    ids_ref   : VMEM (block, 1) int32
    table_ref : VMEM (V, D)   -- full table; block index is constant across grid
    out_ref   : VMEM (block, D)
    """
    block = out_ref.shape[0]
    vocab = table_ref.shape[0]
    col = lax.broadcasted_iota(jnp.int32, (block, vocab), 1)
    onehot = (ids_ref[...] == col).astype(table_ref.dtype)        # (block, V)
    out_ref[...] = jnp.dot(
        onehot, table_ref[...],
        precision=lax.Precision.HIGHEST,          # keep rows (near-)bit-exact
        preferred_element_type=jnp.float32,
    ).astype(out_ref.dtype)


def _onehot_gather(table, flat_ids):
    V, D = table.shape
    n = flat_ids.shape[0]
    block = min(_MAX_BLOCK_ONEHOT, _round_up(n, 8))
    n_pad = _round_up(n, block)
    ids2d = jnp.pad(flat_ids, (0, n_pad - n)).reshape(n_pad, 1)

    out = pl.pallas_call(
        _onehot_gather_kernel,
        out_shape=jax.ShapeDtypeStruct((n_pad, D), table.dtype),
        grid_spec=pltpu.PrefetchScalarGridSpec(
            num_scalar_prefetch=0,
            grid=(n_pad // block,),
            in_specs=[
                pl.BlockSpec((block, 1), lambda i: (i, 0)),  # ids tile
                pl.BlockSpec((V, D), lambda i: (0, 0)),      # whole table (constant block)
            ],
            out_specs=pl.BlockSpec((block, D), lambda i: (i, 0)),
        ),
        compiler_params=pltpu.CompilerParams(
            dimension_semantics=("parallel",),     # rows independent; shards over 2 TCs on v7x
            vmem_limit_bytes=32 * 1024 * 1024,
        ),
    )(ids2d, table)
    return out[:n]


# ---------------------------------------------------------------------------
# Path B: large vocab, table stays in HBM, per-row DMA gather driven by
#         scalar-prefetched ids (scales to arbitrary vocab sizes).
# ---------------------------------------------------------------------------
def _dma_gather_kernel(ids_ref, table_hbm, out_ref, row_buf, sem):
    """Gather `block` rows per grid step from the HBM-resident table via DMA.

    ids_ref   : SMEM (n_pad,) int32   (scalar prefetch)
    table_hbm : HBM/ANY (V, D)        (never copied wholesale into VMEM)
    out_ref   : VMEM (block, D)
    row_buf   : VMEM (block, D) scratch (DMA landing buffer)
    sem       : single DMA semaphore
    """
    block = out_ref.shape[0]
    base = pl.program_id(0) * block

    @pl.loop(0, block)
    def _issue(j):
        row = ids_ref[base + j]
        pltpu.make_async_copy(
            table_hbm.at[pl.ds(row, 1), :], row_buf.at[pl.ds(j, 1), :], sem
        ).start()

    @pl.loop(0, block)
    def _drain(j):
        # Each wait retires one row's worth of bytes from the shared semaphore.
        pltpu.make_async_copy(
            table_hbm.at[pl.ds(0, 1), :], row_buf.at[pl.ds(0, 1), :], sem
        ).wait()

    out_ref[...] = row_buf[...]


def _dma_gather(table, flat_ids):
    V, D = table.shape
    n = flat_ids.shape[0]
    block = min(_MAX_BLOCK_DMA, _round_up(n, 8))
    n_pad = _round_up(n, block)
    ids = jnp.pad(flat_ids, (0, n_pad - n))

    out = pl.pallas_call(
        _dma_gather_kernel,
        out_shape=jax.ShapeDtypeStruct((n_pad, D), table.dtype),
        grid_spec=pltpu.PrefetchScalarGridSpec(
            num_scalar_prefetch=1,
            grid=(n_pad // block,),
            in_specs=[pl.BlockSpec(memory_space=pl.ANY)],   # table stays in HBM
            out_specs=pl.BlockSpec((block, D), lambda i, ids: (i, 0)),
            scratch_shapes=[
                pltpu.VMEM((block, D), table.dtype),
                pltpu.SemaphoreType.DMA,
            ],
        ),
        compiler_params=pltpu.CompilerParams(
            dimension_semantics=("arbitrary",),
        ),
    )(ids, table)
    return out[:n]


# ---------------------------------------------------------------------------
# Wrapper: single fused gather, auto path selection.
# ---------------------------------------------------------------------------
def embedding_lookup(table, ids, *, method="auto"):
    """Pallas equivalent of torch.nn.Embedding(table)(ids)."""
    V, D = table.shape
    ids = jnp.asarray(ids)
    flat = ids.reshape(-1).astype(jnp.int32)
    n = flat.shape[0]
    if n == 0:
        return jnp.zeros(tuple(ids.shape) + (D,), table.dtype)

    # TODO(synk): torch.nn.Embedding raises on out-of-range ids; we clamp so a
    # bad id cannot read arbitrary VMEM or fault the chip.
    flat = jnp.clip(flat, 0, V - 1)

    if method == "auto":
        table_bytes = V * D * jnp.dtype(table.dtype).itemsize
        method = ("onehot"
                  if (V <= _ONEHOT_MAX_VOCAB and table_bytes <= _VMEM_TABLE_BUDGET)
                  else "dma")
    if method == "onehot":
        out = _onehot_gather(table, flat)
    elif method == "dma":
        out = _dma_gather(table, flat)
    else:
        raise ValueError(f"unknown method: {method}")
    return out.reshape(tuple(ids.shape) + (D,))


class Word2VecPallas:
    """Mirrors Word2Vec.__init__ parameter shapes; forward() == three gathers,
    fused into one Pallas gather over the concatenated ids."""

    def __init__(self, vocab_size, embedding_dim, context_size, key,
                 factor_matrix=None):
        k_emb, k_w1, k_b1, k_w2, k_b2 = jax.random.split(key, 5)
        # nn.Embedding default init: N(0, 1)
        self.embeddings = jax.random.normal(
            k_emb, (vocab_size, embedding_dim), dtype=jnp.float32)
        # linear1 / linear2 exist in __init__ but are unused in forward();
        # kept only for parameter-shape fidelity with the PyTorch module.
        h_in = context_size * embedding_dim
        self.linear1_w = jax.random.uniform(
            k_w1, (128, h_in), minval=-1.0, maxval=1.0) / jnp.sqrt(h_in)
        self.linear1_b = jax.random.uniform(
            k_b1, (128,), minval=-1.0, maxval=1.0) / jnp.sqrt(h_in)
        self.linear2_w = jax.random.uniform(
            k_w2, (vocab_size, 128), minval=-1.0, maxval=1.0) / jnp.sqrt(128)
        self.linear2_b = jax.random.uniform(
            k_b2, (vocab_size,), minval=-1.0, maxval=1.0) / jnp.sqrt(128)
        self.factor_matrix = factor_matrix

    def forward(self, context_ids, target_ids, noise_ids):
        parts = (context_ids, target_ids, noise_ids)
        flats = [jnp.asarray(p).reshape(-1) for p in parts]
        sizes = [f.shape[0] for f in flats]
        # Single fused gather: one pallas_call, table streamed once.
        fused = embedding_lookup(self.embeddings, jnp.concatenate(flats))
        D = self.embeddings.shape[1]
        outs, off = [], 0
        for p, s in zip(parts, sizes):
            outs.append(fused[off:off + s].reshape(tuple(p.shape) + (D,)))
            off += s
        return tuple(outs)


if __name__ == "__main__":
    vocab_size = 64
    embedding_dim = 128
    context_size = 4
    batch = 2
    num_noise = 5

    key = jax.random.PRNGKey(0)
    k_model, k_ctx, k_tgt, k_noise, k_big, k_big_ids = jax.random.split(key, 6)

    model = Word2VecPallas(vocab_size, embedding_dim, context_size, k_model)

    context_ids = jax.random.randint(k_ctx, (batch, context_size), 0, vocab_size)
    target_ids = jax.random.randint(k_tgt, (batch,), 0, vocab_size)
    noise_ids = jax.random.randint(k_noise, (batch, num_noise), 0, vocab_size)

    ctx_e, tgt_e, noise_e = model.forward(context_ids, target_ids, noise_ids)
    jax.block_until_ready((ctx_e, tgt_e, noise_e))

    # Correctness vs. plain-JAX gather (== torch.nn.Embedding semantics).
    assert ctx_e.shape == (batch, context_size, embedding_dim)
    assert tgt_e.shape == (batch, embedding_dim)
    assert noise_e.shape == (batch, num_noise, embedding_dim)
    assert jnp.allclose(ctx_e, model.embeddings[context_ids], rtol=1e-6, atol=1e-6)
    assert jnp.allclose(tgt_e, model.embeddings[target_ids], rtol=1e-6, atol=1e-6)
    assert jnp.allclose(noise_e, model.embeddings[noise_ids], rtol=1e-6, atol=1e-6)

    # Also exercise the large-vocab path (HBM-resident table, per-row DMA gather).
    big_vocab = 512
    big_table = jax.random.normal(k_big, (big_vocab, embedding_dim), dtype=jnp.float32)
    big_ids = jax.random.randint(k_big_ids, (3, 7), 0, big_vocab)
    big_out = embedding_lookup(big_table, big_ids, method="dma")
    jax.block_until_ready(big_out)
    assert big_out.shape == (3, 7, embedding_dim)
    assert jnp.allclose(big_out, big_table[big_ids])

    print("KERNEL_OK")
</pallas_src>

<mosaic_0001>
module attributes {stable_mosaic.version = 11 : i64} {
  func.func @_onehot_gather_kernel(%arg0: i32, %arg1: memref<24x1xi32, #tpu.memory_space<vmem>>, %arg2: memref<64x128xf32, #tpu.memory_space<vmem>>, %arg3: memref<24x128xf32, #tpu.memory_space<vmem>>) attributes {dimension_semantics = [#tpu.dimension_semantics<parallel>], iteration_bounds = array<i64: 1>, scalar_prefetch = 0 : i64, scratch_operands = 0 : i64, tpu.core_type = #tpu.core_type<tc>, window_params = [{transform_indices = @transform_0, window_bounds = array<i64: 24, 1>}, {pipeline_mode = #tpu.pipeline_mode<synchronous>, transform_indices = @transform_1, window_bounds = array<i64: 64, 128>}, {transform_indices = @transform_2, window_bounds = array<i64: 24, 128>}]} {
    %0 = tpu.iota {dimensions = array<i32: 1>} : vector<24x64xi32>
    %c0 = arith.constant 0 : index
    %c0_0 = arith.constant 0 : index
    %1 = vector.load %arg1[%c0, %c0_0] : memref<24x1xi32, #tpu.memory_space<vmem>>, vector<24x1xi32>
    %2 = vector.broadcast %1 : vector<24x1xi32> to vector<24x64xi32>
    %3 = arith.cmpi eq, %2, %0 : vector<24x64xi32>
    %4 = arith.extui %3 : vector<24x64xi1> to vector<24x64xi32>
    %5 = arith.sitofp %4 : vector<24x64xi32> to vector<24x64xf32>
    %c0_1 = arith.constant 0 : index
    %c0_2 = arith.constant 0 : index
    %6 = vector.load %arg2[%c0_1, %c0_2] : memref<64x128xf32, #tpu.memory_space<vmem>>, vector<64x128xf32>
    %cst = arith.constant dense<0.000000e+00> : vector<24x128xf32>
    %7 = tpu.matmul %5, %6, %cst {dimension_numbers = #tpu.dot_dimension_numbers<[1], [0], [0], [1], [0, 0, 1, 1], [], []>, precision = #tpu.contract_precision<fp32>} : vector<24x64xf32>, vector<64x128xf32>, vector<24x128xf32> -> vector<24x128xf32>
    %c0_3 = arith.constant 0 : index
    %c0_4 = arith.constant 0 : index
    %8 = vector.load %arg3[%c0_3, %c0_4] : memref<24x128xf32, #tpu.memory_space<vmem>>, vector<24x128xf32>
    tpu.vector_store %arg3[%c0_3, %c0_4], %7 {strides = array<i32>} : memref<24x128xf32, #tpu.memory_space<vmem>>, vector<24x128xf32>,
    return
  }
  func.func @transform_0(%arg0: i32) -> (i32, i32) {
    %c0_i32 = arith.constant 0 : i32
    %c0_i32_0 = arith.constant 0 : i32
    return %arg0, %c0_i32 : i32, i32
  }
  func.func @transform_1(%arg0: i32) -> (i32, i32) {
    %c0_i32 = arith.constant 0 : i32
    %c0_i32_0 = arith.constant 0 : i32
    %c0_i32_1 = arith.constant 0 : i32
    return %c0_i32, %c0_i32_0 : i32, i32
  }
  func.func @transform_2(%arg0: i32) -> (i32, i32) {
    %c0_i32 = arith.constant 0 : i32
    %c0_i32_0 = arith.constant 0 : i32
    return %arg0, %c0_i32 : i32, i32
  }
}

</mosaic_0001>

<llo_original>
// kernel: tpu_custom_call.1
$region0: #{tpu_custom_call.1}
  #allocation0 [shape = 'u32[]', space=smem, size = 0x4, offset = 0x4, fixed_abs, tag = 'smem constant byte address 0x4 - core index']
  #allocation1 [shape = 'u32[72,128]{1,0:T(1,128)}', space=vmem, size = 0x9000, scoped, tag = 'internal scratch']
  %s0 = inlined_call_operand.vmem [shape: s32[24,1], index: 0, kind: input, shape index: {}]
  %s1 = inlined_call_operand.hbm [shape: f32[64,128], index: 1, kind: input, shape index: {}]
  %s2 = inlined_call_operand.hbm [shape: f32[24,128], index: 2, kind: output, shape index: {}]
  %s3 = sld [smem:[#allocation0]]
  $region22: #{tpu_custom_call.1} parent=0
    _
  %s5 = ssub.s32 1, %s3
  %s6 = scalar_select 0, %s5, %s3
  $region1: #{tpu_custom_call.1} parent=0
    #allocation2 [shape = 'u8[32768]{0}', space=vmem, size = 0x8000, scoped, tag = 'input window, operand 1, single buffered']
    #allocation3 [shape = 's32[1]{0}', space=sflag, size = 0x4, scoped, tag = 'scoped memory for tpu_custom_call.1']
    #allocation4 [shape = 's32[1]{0}', space=sflag, size = 0x4, scoped, tag = 'scoped memory for tpu_custom_call.1']
    #allocation5 [shape = 'u8[12288]{0}', space=vmem, size = 0x3000, scoped, tag = 'output window, operand 0, single buffered']
    %7 = vsyncpa [#allocation3], 0
    %8 = vsyncpa [#allocation4], 0
    // Predicated region
    $region2: #{tpu_custom_call.1} parent=1 // pred_check
      _
    $region3: #{tpu_custom_call.1} parent=1 // pred_check_branch
      %10 = sbr.rel (0) target = $region5
    $region4: #{tpu_custom_call.1} parent=1 // pred_region
      _
    $region5: #{tpu_custom_call.1} parent=1 // pred_fallthru
      _
    // Predicated region
    $region6: #{tpu_custom_call.1} parent=1 // pred_check
      _
    $region7: #{tpu_custom_call.1} parent=1 // pred_check_branch
      %12 = sbr.rel (0) target = $region9
    $region8: #{tpu_custom_call.1} parent=1 // pred_region
      %14 = vsyncadd [#allocation3], 0
      %s15 = sshll.u32 %s1, 4
      %s16 = int_to_ptr.hbm [resolvable:$true] %s15
      %s17 = sshll.u32 [#allocation2], 4
      %s18 = int_to_ptr.vmem [resolvable:$true] %s17
      %23 = dma.hbm_to_vmem [thread:$0]  %s16, 1024, %s18, [#allocation3], 128, 128, 8
    $region9: #{tpu_custom_call.1} parent=1 // pred_fallthru
      _
    // Predicated region
    $region10: #{tpu_custom_call.1} parent=1 // pred_check
      _
    $region11: #{tpu_custom_call.1} parent=1 // pred_check_branch
      %25 = sbr.rel (0) target = $region13
    $region12: #{tpu_custom_call.1} parent=1 // pred_region
      %27 = dma.done [#allocation3], 1024
    $region13: #{tpu_custom_call.1} parent=1 // pred_fallthru
      _
    %v28 = vlaneseq
    %v29 = vand.u32 %v28, 127
    %v30 = vld [vmem:[%s0] sm:$0xff]
    %v31 = vld [vmem:[%s0 + $0x8] sm:$0xff]
    %v32 = vld [vmem:[%s0 + $0x10] sm:$0xff]
    %33 = vset.pattern.permute.xlu0 0
    %34 = vperm.xlu0 %33, %v30
    %v35 = vpop.permute.xlu0 %34
    %36 = vset.pattern.permute.xlu0 0
    %37 = vperm.xlu0 %36, %v31
    %v38 = vpop.permute.xlu0 %37
    %39 = vset.pattern.permute.xlu0 0
    %40 = vperm.xlu0 %39, %v32
    %v41 = vpop.permute.xlu0 %40
    %vm42 = vcmp.eq.s32.totalorder %v35, %v29
    %vm43 = vcmp.eq.s32.totalorder %v38, %v29
    %vm44 = vcmp.eq.s32.totalorder %v41, %v29
    %v45 = vsel %vm42, 1, 0
    %v46 = vsel %vm43, 1, 0
    %v47 = vsel %vm44, 1, 0
    %v48 = vcvt.s32.f32 %v45
    %v49 = vcvt.s32.f32 %v46
    %v50 = vcvt.s32.f32 %v47
    %v51 = vld [vmem:[#allocation2] sm:$0xff]
    %v52 = vld [vmem:[#allocation2 + $0x8] sm:$0xff]
    %v53 = vld [vmem:[#allocation2 + $0x10] sm:$0xff]
    %v54 = vld [vmem:[#allocation2 + $0x18] sm:$0xff]
    %v55 = vld [vmem:[#allocation2 + $0x20] sm:$0xff]
    %v56 = vld [vmem:[#allocation2 + $0x28] sm:$0xff]
    %v57 = vld [vmem:[#allocation2 + $0x30] sm:$0xff]
    %v58 = vld [vmem:[#allocation2 + $0x38] sm:$0xff]
    %vm59 = vcmask 523264
    %v61 = vsel %vm59, %v48, 0
    %v64 = vsel %vm59, %v49, 0
    %v67 = vsel %vm59, %v50, 0
    %69 = vmatpush.msra.mxu0 0.0
    %70 = vmatpush.msra.mxu0 0.0
    %71 = vmatpush.msra.mxu0 0.0
    %72 = vmatpush.msra.mxu0 0.0
    %73 = vmatpush.msra.mxu0 0.0
    %74 = vmatpush.msra.mxu0 0.0
    %75 = vmatpush.msra.mxu0 0.0
    %76 = vmatpush.msra.mxu0 0.0
    %v77 = vand.u32 %v58, 4294901760
    %78 = vmatpush.msra.mxu0 %v77
    %v79 = vand.u32 %v57, 4294901760
    %80 = vmatpush.msra.mxu0 %v79
    %v81 = vand.u32 %v56, 4294901760
    %82 = vmatpush.msra.mxu0 %v81
    %v83 = vand.u32 %v55, 4294901760
    %84 = vmatpush.msra.mxu0 %v83
    %v85 = vand.u32 %v54, 4294901760
    %86 = vmatpush.msra.mxu0 %v85
    %v87 = vand.u32 %v53, 4294901760
    %88 = vmatpush.msra.mxu0 %v87
    %v89 = vand.u32 %v52, 4294901760
    %90 = vmatpush.msra.mxu0 %v89
    %v91 = vand.u32 %v51, 4294901760
    %92 = vmatpush.msra.mxu0 %v91
    %v93 = vand.u32 %v61, 4294901760
    %v94 = vsub.f32 %v61, %v93
    %v95 = vand.u32 %v94, 4294901760
    %v96 = vsub.f32 %v94, %v95
    %v97 = vand.u32 %v96, 4294901760
    %98 = vmatmul.f32.gmra.mxu0 %v97
    %v99 = vpop.f32.mrf.mxu0
    %v100 = vadd.f32 0.0, %v99
    %v101 = vand.u32 %v64, 4294901760
    %v102 = vsub.f32 %v64, %v101
    %v103 = vand.u32 %v102, 4294901760
    %v104 = vsub.f32 %v102, %v103
    %v105 = vand.u32 %v104, 4294901760
    %106 = vmatmul.f32.gmra.mxu0 %v105
    %v107 = vpop.f32.mrf.mxu0
    %v108 = vadd.f32 0.0, %v107
    %v109 = vand.u32 %v67, 4294901760
    %v110 = vsub.f32 %v67, %v109
    %v111 = vand.u32 %v110, 4294901760
    %v112 = vsub.f32 %v110, %v111
    %v113 = vand.u32 %v112, 4294901760
    %114 = vmatmul.f32.gmra.mxu0 %v113
    %v115 = vpop.f32.mrf.mxu0
    %v116 = vadd.f32 0.0, %v115
    %117 = vdwg.mxu0
    %118 = vmatpush.msra.mxu0 0.0
    %119 = vmatpush.msra.mxu0 0.0
    %120 = vmatpush.msra.mxu0 0.0
    %121 = vmatpush.msra.mxu0 0.0
    %122 = vmatpush.msra.mxu0 0.0
    %123 = vmatpush.msra.mxu0 0.0
    %124 = vmatpush.msra.mxu0 0.0
    %125 = vmatpush.msra.mxu0 0.0
    %v126 = vand.u32 %v58, 4294901760
    %v127 = vsub.f32 %v58, %v126
    %v128 = vand.u32 %v127, 4294901760
    %v129 = vsub.f32 %v127, %v128
    %v130 = vand.u32 %v129, 4294901760
    %131 = vmatpush.msra.mxu0 %v130
    %v132 = vand.u32 %v57, 4294901760
    %v133 = vsub.f32 %v57, %v132
    %v134 = vand.u32 %v133, 4294901760
    %v135 = vsub.f32 %v133, %v134
    %v136 = vand.u32 %v135, 4294901760
    %137 = vmatpush.msra.mxu0 %v136
    %v138 = vand.u32 %v56, 4294901760
    %v139 = vsub.f32 %v56, %v138
    %v140 = vand.u32 %v139, 4294901760
    %v141 = vsub.f32 %v139, %v140
    %v142 = vand.u32 %v141, 4294901760
    %143 = vmatpush.msra.mxu0 %v142
    %v144 = vand.u32 %v55, 4294901760
    %v145 = vsub.f32 %v55, %v144
    %v146 = vand.u32 %v145, 4294901760
    %v147 = vsub.f32 %v145, %v146
    %v148 = vand.u32 %v147, 4294901760
    %149 = vmatpush.msra.mxu0 %v148
    %v150 = vand.u32 %v54, 4294901760
    %v151 = vsub.f32 %v54, %v150
    %v152 = vand.u32 %v151, 4294901760
    %v153 = vsub.f32 %v151, %v152
    %v154 = vand.u32 %v153, 4294901760
    %155 = vmatpush.msra.mxu0 %v154
    %v156 = vand.u32 %v53, 4294901760
    %v157 = vsub.f32 %v53, %v156
    %v158 = vand.u32 %v157, 4294901760
    %v159 = vsub.f32 %v157, %v158
    %v160 = vand.u32 %v159, 4294901760
    %161 = vmatpush.msra.mxu0 %v160
    %v162 = vand.u32 %v52, 4294901760
    %v163 = vsub.f32 %v52, %v162
    %v164 = vand.u32 %v163, 4294901760
    %v165 = vsub.f32 %v163, %v164
    %v166 = vand.u32 %v165, 4294901760
    %167 = vmatpush.msra.mxu0 %v166
    %v168 = vand.u32 %v51, 4294901760
    %v169 = vsub.f32 %v51, %v168
    %v170 = vand.u32 %v169, 4294901760
    %v171 = vsub.f32 %v169, %v170
    %v172 = vand.u32 %v171, 4294901760
    %173 = vmatpush.msra.mxu0 %v172
    %v174 = vand.u32 %v61, 4294901760
    %175 = vmatmul.f32.gmra.mxu0 %v174
    %v176 = vpop.f32.mrf.mxu0
    %v177 = vadd.f32 %v100, %v176
    %v178 = vand.u32 %v64, 4294901760
    %179 = vmatmul.f32.gmra.mxu0 %v178
    %v180 = vpop.f32.mrf.mxu0
    %v181 = vadd.f32 %v108, %v180
    %v182 = vand.u32 %v67, 4294901760
    %183 = vmatmul.f32.gmra.mxu0 %v182
    %v184 = vpop.f32.mrf.mxu0
    %v185 = vadd.f32 %v116, %v184
    %186 = vdwg.mxu0
    %187 = vmatpush.msra.mxu0 0.0
    %188 = vmatpush.msra.mxu0 0.0
    %189 = vmatpush.msra.mxu0 0.0
    %190 = vmatpush.msra.mxu0 0.0
    %191 = vmatpush.msra.mxu0 0.0
    %192 = vmatpush.msra.mxu0 0.0
    %193 = vmatpush.msra.mxu0 0.0
    %194 = vmatpush.msra.mxu0 0.0
    %v195 = vand.u32 %v58, 4294901760
    %v196 = vsub.f32 %v58, %v195
    %197 = vmatpush.msra.mxu0 %v196
    %v198 = vand.u32 %v57, 4294901760
    %v199 = vsub.f32 %v57, %v198
    %200 = vmatpush.msra.mxu0 %v199
    %v201 = vand.u32 %v56, 4294901760
    %v202 = vsub.f32 %v56, %v201
    %203 = vmatpush.msra.mxu0 %v202
    %v204 = vand.u32 %v55, 4294901760
    %v205 = vsub.f32 %v55, %v204
    %206 = vmatpush.msra.mxu0 %v205
    %v207 = vand.u32 %v54, 4294901760
    %v208 = vsub.f32 %v54, %v207
    %209 = vmatpush.msra.mxu0 %v208
    %v210 = vand.u32 %v53, 4294901760
    %v211 = vsub.f32 %v53, %v210
    %212 = vmatpush.msra.mxu0 %v211
    %v213 = vand.u32 %v52, 4294901760
    %v214 = vsub.f32 %v52, %v213
    %215 = vmatpush.msra.mxu0 %v214
    %v216 = vand.u32 %v51, 4294901760
    %v217 = vsub.f32 %v51, %v216
    %218 = vmatpush.msra.mxu0 %v217
    %v219 = vand.u32 %v61, 4294901760
    %v220 = vsub.f32 %v61, %v219
    %221 = vmatmul.f32.gmra.mxu0 %v220
    %v222 = vpop.f32.mrf.mxu0
    %v223 = vadd.f32 %v177, %v222
    %v224 = vand.u32 %v64, 4294901760
    %v225 = vsub.f32 %v64, %v224
    %226 = vmatmul.f32.gmra.mxu0 %v225
    %v227 = vpop.f32.mrf.mxu0
    %v228 = vadd.f32 %v181, %v227
    %v229 = vand.u32 %v67, 4294901760
    %v230 = vsub.f32 %v67, %v229
    %231 = vmatmul.f32.gmra.mxu0 %v230
    %v232 = vpop.f32.mrf.mxu0
    %v233 = vadd.f32 %v185, %v232
    %234 = vdwg.mxu0
    %235 = vmatpush.msra.mxu0 0.0
    %236 = vmatpush.msra.mxu0 0.0
    %237 = vmatpush.msra.mxu0 0.0
    %238 = vmatpush.msra.mxu0 0.0
    %239 = vmatpush.msra.mxu0 0.0
    %240 = vmatpush.msra.mxu0 0.0
    %241 = vmatpush.msra.mxu0 0.0
    %242 = vmatpush.msra.mxu0 0.0
    %v243 = vand.u32 %v58, 4294901760
    %244 = vmatpush.msra.mxu0 %v243
    %v245 = vand.u32 %v57, 4294901760
    %246 = vmatpush.msra.mxu0 %v245
    %v247 = vand.u32 %v56, 4294901760
    %248 = vmatpush.msra.mxu0 %v247
    %v249 = vand.u32 %v55, 4294901760
    %250 = vmatpush.msra.mxu0 %v249
    %v251 = vand.u32 %v54, 4294901760
    %252 = vmatpush.msra.mxu0 %v251
    %v253 = vand.u32 %v53, 4294901760
    %254 = vmatpush.msra.mxu0 %v253
    %v255 = vand.u32 %v52, 4294901760
    %256 = vmatpush.msra.mxu0 %v255
    %v257 = vand.u32 %v51, 4294901760
    %258 = vmatpush.msra.mxu0 %v257
    %v259 = vand.u32 %v61, 4294901760
    %v260 = vsub.f32 %v61, %v259
    %v261 = vand.u32 %v260, 4294901760
    %262 = vmatmul.f32.gmra.mxu0 %v261
    %v263 = vpop.f32.mrf.mxu0
    %v264 = vadd.f32 %v223, %v263
    %v265 = vand.u32 %v64, 4294901760
    %v266 = vsub.f32 %v64, %v265
    %v267 = vand.u32 %v266, 4294901760
    %268 = vmatmul.f32.gmra.mxu0 %v267
    %v269 = vpop.f32.mrf.mxu0
    %v270 = vadd.f32 %v228, %v269
    %v271 = vand.u32 %v67, 4294901760
    %v272 = vsub.f32 %v67, %v271
    %v273 = vand.u32 %v272, 4294901760
    %274 = vmatmul.f32.gmra.mxu0 %v273
    %v275 = vpop.f32.mrf.mxu0
    %v276 = vadd.f32 %v233, %v275
    %277 = vdwg.mxu0
    %278 = vmatpush.msra.mxu0 0.0
    %279 = vmatpush.msra.mxu0 0.0
    %280 = vmatpush.msra.mxu0 0.0
    %281 = vmatpush.msra.mxu0 0.0
    %282 = vmatpush.msra.mxu0 0.0
    %283 = vmatpush.msra.mxu0 0.0
    %284 = vmatpush.msra.mxu0 0.0
    %285 = vmatpush.msra.mxu0 0.0
    %v286 = vand.u32 %v58, 4294901760
    %v287 = vsub.f32 %v58, %v286
    %v288 = vand.u32 %v287, 4294901760
    %289 = vmatpush.msra.mxu0 %v288
    %v290 = vand.u32 %v57, 4294901760
    %v291 = vsub.f32 %v57, %v290
    %v292 = vand.u32 %v291, 4294901760
    %293 = vmatpush.msra.mxu0 %v292
    %v294 = vand.u32 %v56, 4294901760
    %v295 = vsub.f32 %v56, %v294
    %v296 = vand.u32 %v295, 4294901760
    %297 = vmatpush.msra.mxu0 %v296
    %v298 = vand.u32 %v55, 4294901760
    %v299 = vsub.f32 %v55, %v298
    %v300 = vand.u32 %v299, 4294901760
    %301 = vmatpush.msra.mxu0 %v300
    %v302 = vand.u32 %v54, 4294901760
    %v303 = vsub.f32 %v54, %v302
    %v304 = vand.u32 %v303, 4294901760
    %305 = vmatpush.msra.mxu0 %v304
    %v306 = vand.u32 %v53, 4294901760
    %v307 = vsub.f32 %v53, %v306
    %v308 = vand.u32 %v307, 4294901760
    %309 = vmatpush.msra.mxu0 %v308
    %v310 = vand.u32 %v52, 4294901760
    %v311 = vsub.f32 %v52, %v310
    %v312 = vand.u32 %v311, 4294901760
    %313 = vmatpush.msra.mxu0 %v312
    %v314 = vand.u32 %v51, 4294901760
    %v315 = vsub.f32 %v51, %v314
    %v316 = vand.u32 %v315, 4294901760
    %317 = vmatpush.msra.mxu0 %v316
    %v318 = vand.u32 %v61, 4294901760
    %319 = vmatmul.f32.gmra.mxu0 %v318
    %v320 = vpop.f32.mrf.mxu0
    %v321 = vadd.f32 %v264, %v320
    %v322 = vand.u32 %v64, 4294901760
    %323 = vmatmul.f32.gmra.mxu0 %v322
    %v324 = vpop.f32.mrf.mxu0
    %v325 = vadd.f32 %v270, %v324
    %v326 = vand.u32 %v67, 4294901760
    %327 = vmatmul.f32.gmra.mxu0 %v326
    %v328 = vpop.f32.mrf.mxu0
    %v329 = vadd.f32 %v276, %v328
    %330 = vdwg.mxu0
    %331 = vmatpush.msra.mxu0 0.0
    %332 = vmatpush.msra.mxu0 0.0
    %333 = vmatpush.msra.mxu0 0.0
    %334 = vmatpush.msra.mxu0 0.0
    %335 = vmatpush.msra.mxu0 0.0
    %336 = vmatpush.msra.mxu0 0.0
    %337 = vmatpush.msra.mxu0 0.0
    %338 = vmatpush.msra.mxu0 0.0
    %v339 = vand.u32 %v58, 4294901760
    %340 = vmatpush.msra.mxu0 %v339
    %v341 = vand.u32 %v57, 4294901760
    %342 = vmatpush.msra.mxu0 %v341
    %v343 = vand.u32 %v56, 4294901760
    %344 = vmatpush.msra.mxu0 %v343
    %v345 = vand.u32 %v55, 4294901760
    %346 = vmatpush.msra.mxu0 %v345
    %v347 = vand.u32 %v54, 4294901760
    %348 = vmatpush.msra.mxu0 %v347
    %v349 = vand.u32 %v53, 4294901760
    %350 = vmatpush.msra.mxu0 %v349
    %v351 = vand.u32 %v52, 4294901760
    %352 = vmatpush.msra.mxu0 %v351
    %v353 = vand.u32 %v51, 4294901760
    %354 = vmatpush.msra.mxu0 %v353
    %v355 = vand.u32 %v61, 4294901760
    %356 = vmatmul.f32.gmra.mxu0 %v355
    %v357 = vpop.f32.mrf.mxu0
    %v358 = vadd.f32 %v321, %v357
    %v359 = vand.u32 %v64, 4294901760
    %360 = vmatmul.f32.gmra.mxu0 %v359
    %v361 = vpop.f32.mrf.mxu0
    %v362 = vadd.f32 %v325, %v361
    %v363 = vand.u32 %v67, 4294901760
    %364 = vmatmul.f32.gmra.mxu0 %v363
    %v365 = vpop.f32.mrf.mxu0
    %v366 = vadd.f32 %v329, %v365
    %367 = vdwg.mxu0
    %368 = vst [vmem:[#allocation5] sm:$0xff] %v358
    %369 = vst [vmem:[#allocation5 + $0x8] sm:$0xff] %v362
    %370 = vst [vmem:[#allocation5 + $0x10] sm:$0xff] %v366
    // Predicated region
    $region14: #{tpu_custom_call.1} parent=1 // pred_check
      _
    $region15: #{tpu_custom_call.1} parent=1 // pred_check_branch
      %372 = sbr.rel (0) target = $region17
    $region16: #{tpu_custom_call.1} parent=1 // pred_region
      %374 = vsyncadd [#allocation4], 0
      %s375 = sshll.u32 [#allocation5], 4
      %s376 = int_to_ptr.vmem [resolvable:$true] %s375
      %s377 = sshll.u32 %s2, 4
      %s378 = int_to_ptr.hbm [resolvable:$true] %s377
      %383 = dma.vmem_to_hbm [thread:$0]  %s376, 384, %s378, [#allocation4], 128, 128, 8
    $region17: #{tpu_custom_call.1} parent=1 // pred_fallthru
      _
    // Predicated region
    $region18: #{tpu_custom_call.1} parent=1 // pred_check
      _
    $region19: #{tpu_custom_call.1} parent=1 // pred_check_branch
      %385 = sbr.rel (0) target = $region21
    $region20: #{tpu_custom_call.1} parent=1 // pred_region
      %387 = dma.done [#allocation4], 384
    $region21: #{tpu_custom_call.1} parent=1 // pred_fallthru
      _
    %388 = vsyncpa [#allocation3], 1
    %389 = vsyncpa [#allocation4], 1

</llo_original>
